<compile_context>
chip_gen: v7x
topology: tpu7x:2x2x1
jax: 0.10.0
libtpu: 0.0.40
codegen_flags: <defaults>
</compile_context>

<pallas_src>
import functools
import math

import jax
import jax.numpy as jnp
from jax import lax
from jax.experimental import pallas as pl
from jax.experimental.pallas import tpu as pltpu


# ----------------------------- Fused Pallas kernel -----------------------------

def _fused_attention_kernel(x_ref, ctx_ref, wq_ref, wkv_ref, wo_ref, bo_ref,
                            out_ref, *, heads, dim_head, scale):
    """One grid step: one (batch, query-token-tile) slice, full forward in VMEM."""
    x_b = x_ref[0]                 # (TN, Cq)
    ctx_b = ctx_ref[0]             # (M,  Cc)
    inner = heads * dim_head

    # Projections on the MXU (f32 accumulation). `scale` folded into q once.
    q = jnp.dot(x_b, wq_ref[...], preferred_element_type=jnp.float32) * scale   # (TN, inner)
    kv = jnp.dot(ctx_b, wkv_ref[...], preferred_element_type=jnp.float32)       # (M, 2*inner)

    # Per-head attention via static lane slices — no head transposes, no k.T.
    head_outs = []
    for h in range(heads):
        lo = h * dim_head
        q_h = q[:, lo:lo + dim_head]                          # (TN, D)
        k_h = kv[:, lo:lo + dim_head]                         # (M, D)
        v_h = kv[:, inner + lo:inner + lo + dim_head]         # (M, D)

        # q·k^T by contracting the last dims directly (no transpose materialized).
        sim = lax.dot_general(q_h, k_h, (((1,), (1,)), ((), ())),
                              preferred_element_type=jnp.float32)               # (TN, M)

        # Softmax in f32 (max-subtracted), EUP approx reciprocal for the denom.
        m = jnp.max(sim, axis=-1, keepdims=True)
        p = jnp.exp(sim - m)
        denom = jnp.sum(p, axis=-1, keepdims=True)
        attn = p * pl.reciprocal(denom, approx=True)

        head_outs.append(jnp.dot(attn, v_h, preferred_element_type=jnp.float32))  # (TN, D)

    # '(b h) n d -> b n (h d)': heads re-packed lane-dense, still in VMEM.
    o = jnp.concatenate(head_outs, axis=-1)                                      # (TN, inner)

    # Output projection + bias; DropPath(0.0) == identity.
    out = jnp.dot(o, wo_ref[...], preferred_element_type=jnp.float32) + bo_ref[...]
    out_ref[0] = out.astype(out_ref.dtype)


def _choose_query_tile(n, max_tile=512):
    """Largest query-token tile <= max_tile that keeps blocks (8,128)-legal."""
    if n <= max_tile:
        return n
    t = max_tile - (max_tile % 8)
    while t >= 8:
        if n % t == 0:
            return t
        t -= 8
    return n


def attention_forward(params, x, context=None):
    """x: (B, N, query_dim), context: (B, M, context_dim) or None."""
    # TODO(synk): optional `mask` argument not implemented (example path uses mask=None).
    # TODO(synk): for very long contexts, add a flash-style KV grid axis (online
    #             softmax); here the full context block is resident per step.
    B, N, Cq = x.shape
    ctx = x if context is None else context
    M, Cc = ctx.shape[1], ctx.shape[2]
    h, d = params.heads, params.dim_head
    inner = h * d

    tn = _choose_query_tile(N)
    grid = (B, pl.cdiv(N, tn))

    kernel = functools.partial(_fused_attention_kernel,
                               heads=h, dim_head=d, scale=params.scale)

    return pl.pallas_call(
        kernel,
        out_shape=jax.ShapeDtypeStruct((B, N, Cq), x.dtype),
        grid_spec=pl.GridSpec(
            grid=grid,
            in_specs=[
                pl.BlockSpec((1, tn, Cq), lambda b, i: (b, i, 0)),       # x tile
                pl.BlockSpec((1, M, Cc), lambda b, i: (b, 0, 0)),        # full context
                pl.BlockSpec((Cq, inner), lambda b, i: (0, 0)),          # Wq^T (resident)
                pl.BlockSpec((Cc, 2 * inner), lambda b, i: (0, 0)),      # Wkv^T (resident)
                pl.BlockSpec((inner, Cq), lambda b, i: (0, 0)),          # Wo^T (resident)
                pl.BlockSpec((1, Cq), lambda b, i: (0, 0)),              # b_out (resident)
            ],
            out_specs=pl.BlockSpec((1, tn, Cq), lambda b, i: (b, i, 0)),
        ),
        compiler_params=pltpu.CompilerParams(
            dimension_semantics=("parallel", "parallel")),
    )(x, ctx, params.w_q_t, params.w_kv_t, params.w_out_t, params.b_out_2d)


# ----------------------------- Parameters -----------------------------

class AttentionParams:
    """Deterministic parameter init matching nn.Linear shapes (weight: (out, in))."""

    def __init__(self, key, query_dim, context_dim=None, heads=8, dim_head=64):
        inner_dim = dim_head * heads
        context_dim = query_dim if context_dim is None else context_dim
        self.heads = heads
        self.dim_head = dim_head
        self.scale = dim_head ** (-0.5)
        k1, k2, k3, k4 = jax.random.split(key, 4)
        s_q = 1.0 / math.sqrt(query_dim)
        s_c = 1.0 / math.sqrt(context_dim)
        s_i = 1.0 / math.sqrt(inner_dim)
        self.w_q = jax.random.uniform(k1, (inner_dim, query_dim), jnp.float32, -s_q, s_q)
        self.w_kv = jax.random.uniform(k2, (inner_dim * 2, context_dim), jnp.float32, -s_c, s_c)
        self.w_out = jax.random.uniform(k3, (query_dim, inner_dim), jnp.float32, -s_i, s_i)
        self.b_out = jax.random.uniform(k4, (query_dim,), jnp.float32, -s_i, s_i)
        # Pre-transposed copies (built once at init) so the kernel consumes
        # (in, out) layouts with no per-call XLA transposes.
        self.w_q_t = self.w_q.T              # (query_dim, inner)
        self.w_kv_t = self.w_kv.T            # (context_dim, 2*inner)
        self.w_out_t = self.w_out.T          # (inner, query_dim)
        self.b_out_2d = self.b_out.reshape(1, query_dim)


# ----------------------------- Plain-JAX reference -----------------------------

def attention_reference(params, x, context=None):
    B, N, Cq = x.shape
    ctx = x if context is None else context
    M = ctx.shape[1]
    h, d = params.heads, params.dim_head
    inner = h * d
    q = x @ params.w_q.T
    kv = ctx @ params.w_kv.T
    k, v = kv[..., :inner], kv[..., inner:]

    def split(t, n_tok):
        return t.reshape(B, n_tok, h, d).transpose(0, 2, 1, 3).reshape(B * h, n_tok, d)

    qh, kh, vh = split(q, N), split(k, M), split(v, M)
    sim = jnp.einsum('bid,bjd->bij', qh, kh) * params.scale
    attn = jax.nn.softmax(sim, axis=-1)
    o = jnp.einsum('bij,bjd->bid', attn, vh)
    o = o.reshape(B, h, N, d).transpose(0, 2, 1, 3).reshape(B, N, inner)
    return o @ params.w_out.T + params.b_out


# ----------------------------- Main -----------------------------

if __name__ == "__main__":
    key = jax.random.PRNGKey(0)
    k_param, k_x = jax.random.split(key)

    B, N = 2, 8
    query_dim = 32
    heads, dim_head = 2, 16   # inner_dim = 32

    params = AttentionParams(k_param, query_dim, context_dim=None,
                             heads=heads, dim_head=dim_head)
    x = jax.random.normal(k_x, (B, N, query_dim), jnp.float32)

    out = attention_forward(params, x, context=None)
    out = jax.block_until_ready(out)

    ref = attention_reference(params, x, context=None)
    assert out.shape == (B, N, query_dim)
    err = float(jnp.max(jnp.abs(out - ref)))
    # approx reciprocal in the softmax denom changes results at the ~1e-4 level.
    assert err < 5e-3, f"mismatch vs reference: max abs err {err:.2e}"

    print("KERNEL_OK")
</pallas_src>

<mosaic_0001>
module attributes {stable_mosaic.version = 11 : i64} {
  func.func @_fused_attention_kernel(%arg0: i32, %arg1: i32, %arg2: memref<1x8x32xf32, #tpu.memory_space<vmem>>, %arg3: memref<1x8x32xf32, #tpu.memory_space<vmem>>, %arg4: memref<32x32xf32, #tpu.memory_space<vmem>>, %arg5: memref<32x64xf32, #tpu.memory_space<vmem>>, %arg6: memref<32x32xf32, #tpu.memory_space<vmem>>, %arg7: memref<1x32xf32, #tpu.memory_space<vmem>>, %arg8: memref<1x8x32xf32, #tpu.memory_space<vmem>>) attributes {dimension_semantics = [#tpu.dimension_semantics<parallel>, #tpu.dimension_semantics<parallel>], iteration_bounds = array<i64: 2, 1>, scalar_prefetch = 0 : i64, scratch_operands = 0 : i64, tpu.core_type = #tpu.core_type<tc>, window_params = [{transform_indices = @transform_0, window_bounds = array<i64: 1, 8, 32>}, {transform_indices = @transform_1, window_bounds = array<i64: 1, 8, 32>}, {pipeline_mode = #tpu.pipeline_mode<synchronous>, transform_indices = @transform_2, window_bounds = array<i64: 32, 32>}, {pipeline_mode = #tpu.pipeline_mode<synchronous>, transform_indices = @transform_3, window_bounds = array<i64: 32, 64>}, {pipeline_mode = #tpu.pipeline_mode<synchronous>, transform_indices = @transform_4, window_bounds = array<i64: 32, 32>}, {pipeline_mode = #tpu.pipeline_mode<synchronous>, transform_indices = @transform_5, window_bounds = array<i64: 1, 32>}, {transform_indices = @transform_6, window_bounds = array<i64: 1, 8, 32>}]} {
    %c0 = arith.constant 0 : index
    %c0_0 = arith.constant 0 : index
    %c0_1 = arith.constant 0 : index
    %0 = vector.load %arg2[%c0, %c0_0, %c0_1] : memref<1x8x32xf32, #tpu.memory_space<vmem>>, vector<1x8x32xf32>
    %1 = vector.shape_cast %0 : vector<1x8x32xf32> to vector<8x32xf32>
    %c0_2 = arith.constant 0 : index
    %c0_3 = arith.constant 0 : index
    %c0_4 = arith.constant 0 : index
    %2 = vector.load %arg3[%c0_2, %c0_3, %c0_4] : memref<1x8x32xf32, #tpu.memory_space<vmem>>, vector<1x8x32xf32>
    %3 = vector.shape_cast %2 : vector<1x8x32xf32> to vector<8x32xf32>
    %c0_5 = arith.constant 0 : index
    %c0_6 = arith.constant 0 : index
    %4 = vector.load %arg4[%c0_5, %c0_6] : memref<32x32xf32, #tpu.memory_space<vmem>>, vector<32x32xf32>
    %cst = arith.constant dense<0.000000e+00> : vector<8x32xf32>
    %5 = tpu.matmul %1, %4, %cst {dimension_numbers = #tpu.dot_dimension_numbers<[1], [0], [0], [1], [0, 0, 1, 1], [], []>} : vector<8x32xf32>, vector<32x32xf32>, vector<8x32xf32> -> vector<8x32xf32>
    %cst_7 = arith.constant 2.500000e-01 : f32
    %6 = vector.broadcast %cst_7 : f32 to vector<8x32xf32>
    %7 = arith.mulf %5, %6 : vector<8x32xf32>
    %c0_8 = arith.constant 0 : index
    %c0_9 = arith.constant 0 : index
    %8 = vector.load %arg5[%c0_8, %c0_9] : memref<32x64xf32, #tpu.memory_space<vmem>>, vector<32x64xf32>
    %cst_10 = arith.constant dense<0.000000e+00> : vector<8x64xf32>
    %9 = tpu.matmul %3, %8, %cst_10 {dimension_numbers = #tpu.dot_dimension_numbers<[1], [0], [0], [1], [0, 0, 1, 1], [], []>} : vector<8x32xf32>, vector<32x64xf32>, vector<8x64xf32> -> vector<8x64xf32>
    %10 = vector.extract_strided_slice %7 {offsets = [0, 0], sizes = [8, 16], strides = [1, 1]} : vector<8x32xf32> to vector<8x16xf32>
    %11 = vector.extract_strided_slice %9 {offsets = [0, 0], sizes = [8, 16], strides = [1, 1]} : vector<8x64xf32> to vector<8x16xf32>
    %12 = vector.extract_strided_slice %9 {offsets = [0, 32], sizes = [8, 16], strides = [1, 1]} : vector<8x64xf32> to vector<8x16xf32>
    %cst_11 = arith.constant dense<0.000000e+00> : vector<8x8xf32>
    %13 = tpu.matmul %10, %11, %cst_11 {dimension_numbers = #tpu.dot_dimension_numbers<[1], [1], [0], [0], [0, 0, 1, 0], [], []>} : vector<8x16xf32>, vector<8x16xf32>, vector<8x8xf32> -> vector<8x8xf32>
    %cst_12 = arith.constant dense<0xFF800000> : vector<8xf32>
    %14 = vector.multi_reduction <maximumf>, %13, %cst_12 [1] : vector<8x8xf32> to vector<8xf32>
    %15 = vector.shape_cast %14 : vector<8xf32> to vector<8x1xf32>
    %16 = vector.broadcast %15 : vector<8x1xf32> to vector<8x8xf32>
    %17 = arith.subf %13, %16 : vector<8x8xf32>
    %18 = math.exp %17 : vector<8x8xf32>
    %cst_13 = arith.constant dense<0.000000e+00> : vector<8xf32>
    %19 = vector.multi_reduction <add>, %18, %cst_13 [1] : vector<8x8xf32> to vector<8xf32>
    %20 = vector.shape_cast %19 : vector<8xf32> to vector<8x1xf32>
    %21 = tpu.reciprocal %20 {approx = true} : vector<8x1xf32> -> vector<8x1xf32>
    %22 = vector.broadcast %21 : vector<8x1xf32> to vector<8x8xf32>
    %23 = arith.mulf %18, %22 : vector<8x8xf32>
    %cst_14 = arith.constant dense<0.000000e+00> : vector<8x16xf32>
    %24 = tpu.matmul %23, %12, %cst_14 {dimension_numbers = #tpu.dot_dimension_numbers<[1], [0], [0], [1], [0, 0, 1, 1], [], []>} : vector<8x8xf32>, vector<8x16xf32>, vector<8x16xf32> -> vector<8x16xf32>
    %25 = vector.extract_strided_slice %7 {offsets = [0, 16], sizes = [8, 16], strides = [1, 1]} : vector<8x32xf32> to vector<8x16xf32>
    %26 = vector.extract_strided_slice %9 {offsets = [0, 16], sizes = [8, 16], strides = [1, 1]} : vector<8x64xf32> to vector<8x16xf32>
    %27 = vector.extract_strided_slice %9 {offsets = [0, 48], sizes = [8, 16], strides = [1, 1]} : vector<8x64xf32> to vector<8x16xf32>
    %cst_15 = arith.constant dense<0.000000e+00> : vector<8x8xf32>
    %28 = tpu.matmul %25, %26, %cst_15 {dimension_numbers = #tpu.dot_dimension_numbers<[1], [1], [0], [0], [0, 0, 1, 0], [], []>} : vector<8x16xf32>, vector<8x16xf32>, vector<8x8xf32> -> vector<8x8xf32>
    %cst_16 = arith.constant dense<0xFF800000> : vector<8xf32>
    %29 = vector.multi_reduction <maximumf>, %28, %cst_16 [1] : vector<8x8xf32> to vector<8xf32>
    %30 = vector.shape_cast %29 : vector<8xf32> to vector<8x1xf32>
    %31 = vector.broadcast %30 : vector<8x1xf32> to vector<8x8xf32>
    %32 = arith.subf %28, %31 : vector<8x8xf32>
    %33 = math.exp %32 : vector<8x8xf32>
    %cst_17 = arith.constant dense<0.000000e+00> : vector<8xf32>
    %34 = vector.multi_reduction <add>, %33, %cst_17 [1] : vector<8x8xf32> to vector<8xf32>
    %35 = vector.shape_cast %34 : vector<8xf32> to vector<8x1xf32>
    %36 = tpu.reciprocal %35 {approx = true} : vector<8x1xf32> -> vector<8x1xf32>
    %37 = vector.broadcast %36 : vector<8x1xf32> to vector<8x8xf32>
    %38 = arith.mulf %33, %37 : vector<8x8xf32>
    %cst_18 = arith.constant dense<0.000000e+00> : vector<8x16xf32>
    %39 = tpu.matmul %38, %27, %cst_18 {dimension_numbers = #tpu.dot_dimension_numbers<[1], [0], [0], [1], [0, 0, 1, 1], [], []>} : vector<8x8xf32>, vector<8x16xf32>, vector<8x16xf32> -> vector<8x16xf32>
    %40 = tpu.concatenate %24, %39 in 1 : vector<8x16xf32>, vector<8x16xf32> -> vector<8x32xf32>
    %c0_19 = arith.constant 0 : index
    %c0_20 = arith.constant 0 : index
    %41 = vector.load %arg6[%c0_19, %c0_20] : memref<32x32xf32, #tpu.memory_space<vmem>>, vector<32x32xf32>
    %cst_21 = arith.constant dense<0.000000e+00> : vector<8x32xf32>
    %42 = tpu.matmul %40, %41, %cst_21 {dimension_numbers = #tpu.dot_dimension_numbers<[1], [0], [0], [1], [0, 0, 1, 1], [], []>} : vector<8x32xf32>, vector<32x32xf32>, vector<8x32xf32> -> vector<8x32xf32>
    %c0_22 = arith.constant 0 : index
    %c0_23 = arith.constant 0 : index
    %43 = vector.load %arg7[%c0_22, %c0_23] : memref<1x32xf32, #tpu.memory_space<vmem>>, vector<1x32xf32>
    %44 = vector.broadcast %43 : vector<1x32xf32> to vector<8x32xf32>
    %45 = arith.addf %42, %44 : vector<8x32xf32>
    %c0_24 = arith.constant 0 : index
    %c0_25 = arith.constant 0 : index
    %c0_26 = arith.constant 0 : index
    %46 = vector.load %arg8[%c0_24, %c0_25, %c0_26] : memref<1x8x32xf32, #tpu.memory_space<vmem>>, vector<1x8x32xf32>
    %47 = vector.shape_cast %46 : vector<1x8x32xf32> to vector<8x32xf32>
    %48 = vector.shape_cast %45 : vector<8x32xf32> to vector<1x8x32xf32>
    tpu.vector_store %arg8[%c0_24, %c0_25, %c0_26], %48 {strides = array<i32>} : memref<1x8x32xf32, #tpu.memory_space<vmem>>, vector<1x8x32xf32>,
    return
  }
  func.func @transform_0(%arg0: i32, %arg1: i32) -> (i32, i32, i32) {
    %c0_i32 = arith.constant 0 : i32
    %c0_i32_0 = arith.constant 0 : i32
    return %arg0, %arg1, %c0_i32 : i32, i32, i32
  }
  func.func @transform_1(%arg0: i32, %arg1: i32) -> (i32, i32, i32) {
    %c0_i32 = arith.constant 0 : i32
    %c0_i32_0 = arith.constant 0 : i32
    %c0_i32_1 = arith.constant 0 : i32
    return %arg0, %c0_i32, %c0_i32_0 : i32, i32, i32
  }
  func.func @transform_2(%arg0: i32, %arg1: i32) -> (i32, i32) {
    %c0_i32 = arith.constant 0 : i32
    %c0_i32_0 = arith.constant 0 : i32
    %c0_i32_1 = arith.constant 0 : i32
    return %c0_i32, %c0_i32_0 : i32, i32
  }
  func.func @transform_3(%arg0: i32, %arg1: i32) -> (i32, i32) {
    %c0_i32 = arith.constant 0 : i32
    %c0_i32_0 = arith.constant 0 : i32
    %c0_i32_1 = arith.constant 0 : i32
    return %c0_i32, %c0_i32_0 : i32, i32
  }
  func.func @transform_4(%arg0: i32, %arg1: i32) -> (i32, i32) {
    %c0_i32 = arith.constant 0 : i32
    %c0_i32_0 = arith.constant 0 : i32
    %c0_i32_1 = arith.constant 0 : i32
    return %c0_i32, %c0_i32_0 : i32, i32
  }
  func.func @transform_5(%arg0: i32, %arg1: i32) -> (i32, i32) {
    %c0_i32 = arith.constant 0 : i32
    %c0_i32_0 = arith.constant 0 : i32
    %c0_i32_1 = arith.constant 0 : i32
    return %c0_i32, %c0_i32_0 : i32, i32
  }
  func.func @transform_6(%arg0: i32, %arg1: i32) -> (i32, i32, i32) {
    %c0_i32 = arith.constant 0 : i32
    %c0_i32_0 = arith.constant 0 : i32
    return %arg0, %arg1, %c0_i32 : i32, i32, i32
  }
}

</mosaic_0001>

<llo_original>
// kernel: tpu_custom_call.1
$region0: #{tpu_custom_call.1}
  #allocation0 [shape = 'u32[]', space=smem, size = 0x4, offset = 0x4, fixed_abs, tag = 'smem constant byte address 0x4 - core index']
  #allocation1 [shape = 'u32[144,128]{1,0:T(1,128)}', space=vmem, size = 0x12000, scoped, tag = 'internal scratch']
  %s0 = inlined_call_operand.hbm [shape: f32[2,8,32], index: 0, kind: input, shape index: {}]
  %s1 = inlined_call_operand.hbm [shape: f32[2,8,32], index: 1, kind: input, shape index: {}]
  %s2 = inlined_call_operand.hbm [shape: f32[32,32], index: 2, kind: input, shape index: {}]
  %s3 = inlined_call_operand.hbm [shape: f32[32,64], index: 3, kind: input, shape index: {}]
  %s4 = inlined_call_operand.hbm [shape: f32[32,32], index: 4, kind: input, shape index: {}]
  %s5 = inlined_call_operand.vmem [shape: f32[1,32], index: 5, kind: input, shape index: {}]
  %s6 = inlined_call_operand.hbm [shape: f32[2,8,32], index: 6, kind: output, shape index: {}]
  %s7 = sld [smem:[#allocation0]]
  $region77: #{tpu_custom_call.1} parent=0
    _
  %s9 = ssub.s32 1, %s7
  %s10 = scalar_select 0, %s9, %s7
  $region1: #{tpu_custom_call.1} parent=0
    #allocation2 [shape = 'u8[8192]{0}', space=vmem, size = 0x2000, scoped, tag = 'input window, operand 0']
    #allocation3 [shape = 's32[2]{0}', space=sflag, size = 0x8, scoped, tag = 'scoped memory for tpu_custom_call.1']
    #allocation4 [shape = 's32[2]{0}', space=sflag, size = 0x8, scoped, tag = 'scoped memory for tpu_custom_call.1']
    #allocation5 [shape = 'u8[8192]{0}', space=vmem, size = 0x2000, scoped, tag = 'input window, operand 1']
    #allocation6 [shape = 's32[2]{0}', space=sflag, size = 0x8, scoped, tag = 'scoped memory for tpu_custom_call.1']
    #allocation7 [shape = 'u8[16384]{0}', space=vmem, size = 0x4000, scoped, tag = 'input window, operand 2, single buffered']
    #allocation8 [shape = 'u8[16384]{0}', space=vmem, size = 0x4000, scoped, tag = 'input window, operand 3, single buffered']
    #allocation9 [shape = 's32[1]{0}', space=sflag, size = 0x4, scoped, tag = 'scoped memory for tpu_custom_call.1']
    #allocation10 [shape = 'u8[16384]{0}', space=vmem, size = 0x4000, scoped, tag = 'input window, operand 4, single buffered']
    #allocation11 [shape = 'u8[8192]{0}', space=vmem, size = 0x2000, scoped, tag = 'output window, operand 0']
    %11 = vsyncpa [#allocation3], 0
    %s12 = scalar_lea.sflag [#allocation3], 1
    %13 = vsyncpa %s12, 0
    %14 = vsyncpa [#allocation6], 0
    %s15 = scalar_lea.sflag [#allocation6], 1
    %16 = vsyncpa %s15, 0
    %17 = vsyncpa [#allocation9], 0
    %18 = vsyncpa [#allocation4], 0
    %s19 = scalar_lea.sflag [#allocation4], 1
    %20 = vsyncpa %s19, 0
    loop: start=0, step=1, limit=4
    $region2: #{tpu_custom_call.1} parent=1 // loop_pre_header
      _
    $region3: #{tpu_custom_call.1} parent=1 // loop_header
      %s22 = sphi 0, %s26
      %p23 = scmp.ge.s32.totalorder %s22, 4
      %s29 = sphi 0, %s41
      %s30 = sphi 0, %s37
      %s31 = sphi 0, %s29
      %s32 = sphi 0, %s30
      %s33 = sphi 0, %s31
      %s34 = sphi 0, %s32
      %s46 = sphi 0, %s48
      %s49 = sphi 0, %s46
      %s50 = sphi 0, %s49
      %s66 = sphi 0, %s50
      %s72 = sphi 0, %s74
      %s75 = sphi 0, %s72
      %s76 = sphi 0, %s75
      %s92 = sphi 0, %s76
      %s96 = sphi 0, %s96
      %s98 = sphi 0, %s96
      %s99 = sphi 0, %s98
      %s113 = sphi 0, %s99
      %s117 = sphi 0, %s117
      %s119 = sphi 0, %s117
      %s120 = sphi 0, %s119
      %s134 = sphi 0, %s120
      %s138 = sphi 0, %s138
      %s140 = sphi 0, %s138
      %s141 = sphi 0, %s140
      %s155 = sphi 0, %s141
      %s159 = sphi 0, %s159
      %s161 = sphi 0, %s159
      %s162 = sphi 0, %s161
      %s176 = sphi 0, %s162
      %s184 = sphi 0, %s186
      %s187 = sphi 0, %s184
      %s188 = sphi 0, %s187
      %s204 = sphi 0, %s188
    $region4: #{tpu_custom_call.1} parent=1 // loop_header_branch
      %25 = sbr.rel (%p23) target = $region8
    $region5: #{tpu_custom_call.1} parent=1 // loop_body
      %s27 = ssub.s32 %s22, 1
      %s28 = ssub.s32 %s22, 2
      %s35 = sadd.s32 1, %s30
      %p36 = scmp.ge.s32.totalorder %s35, 1
      %s37 = scalar_select %p36, 0, %s35
      %s38 = sadd.s32 1, %s29
      %s39 = scalar_select %p36, %s38, %s29
      %p40 = scmp.ge.s32.totalorder %s39, 2
      %s41 = scalar_select %p40, 0, %s39
      %s42 = ssub.s32 %s29, %s41
      %s43 = ssub.s32 %s30, %s37
      %s44 = sor.u32 %s42, %s43
      %p45 = scmp.eq.s32.totalorder %s44, 0
      %s47 = sadd.s32 %s46, 1
      %s48 = scalar_select %p45, %s46, %s47
      %p51 = pneg %p45
      %p52 = scmp.eq.s32.totalorder %s22, 1
      %p53 = por %p51, %p52
      %p54 = scmp.ne.s32.totalorder %s46, %s49
      %p55 = scmp.eq.s32.totalorder %s22, 0
      %p56 = por %p54, %p55
      %p57 = scmp.ne.s32.totalorder %s46, %s49
      %p58 = scmp.eq.s32.totalorder %s27, 1
      %p59 = por %p57, %p58
      %p60 = scmp.ne.s32.totalorder %s49, %s50
      %p61 = scmp.eq.s32.totalorder %s27, 0
      %p62 = por %p60, %p61
      %p63 = scmp.ne.s32.totalorder %s49, %s50
      %p64 = scmp.eq.s32.totalorder %s28, 1
      %p65 = por %p63, %p64
      %p67 = scmp.ne.s32.totalorder %s50, %s66
      %p68 = scmp.eq.s32.totalorder %s28, 0
      %p69 = por %p67, %p68
      %s70 = ssub.s32 %s29, %s41
      %p71 = scmp.eq.s32.totalorder %s70, 0
      %s73 = sadd.s32 %s72, 1
      %s74 = scalar_select %p71, %s72, %s73
      %p77 = pneg %p71
      %p78 = scmp.eq.s32.totalorder %s22, 1
      %p79 = por %p77, %p78
      %p80 = scmp.ne.s32.totalorder %s72, %s75
      %p81 = scmp.eq.s32.totalorder %s22, 0
      %p82 = por %p80, %p81
      %p83 = scmp.ne.s32.totalorder %s72, %s75
      %p84 = scmp.eq.s32.totalorder %s27, 1
      %p85 = por %p83, %p84
      %p86 = scmp.ne.s32.totalorder %s75, %s76
      %p87 = scmp.eq.s32.totalorder %s27, 0
      %p88 = por %p86, %p87
      %p89 = scmp.ne.s32.totalorder %s75, %s76
      %p90 = scmp.eq.s32.totalorder %s28, 1
      %p91 = por %p89, %p90
      %p93 = scmp.ne.s32.totalorder %s76, %s92
      %p94 = scmp.eq.s32.totalorder %s28, 0
      %p95 = por %p93, %p94
      %s97 = sadd.s32 %s96, 1
      %p100 = scmp.eq.s32.totalorder %s22, 1
      %p101 = scmp.ne.s32.totalorder %s96, %s98
      %p102 = scmp.eq.s32.totalorder %s22, 0
      %p103 = por %p101, %p102
      %p104 = scmp.ne.s32.totalorder %s96, %s98
      %p105 = scmp.eq.s32.totalorder %s27, 1
      %p106 = por %p104, %p105
      %p107 = scmp.ne.s32.totalorder %s98, %s99
      %p108 = scmp.eq.s32.totalorder %s27, 0
      %p109 = por %p107, %p108
      %p110 = scmp.ne.s32.totalorder %s98, %s99
      %p111 = scmp.eq.s32.totalorder %s28, 1
      %p112 = por %p110, %p111
      %p114 = scmp.ne.s32.totalorder %s99, %s113
      %p115 = scmp.eq.s32.totalorder %s28, 0
      %p116 = por %p114, %p115
      %s118 = sadd.s32 %s117, 1
      %p121 = scmp.eq.s32.totalorder %s22, 1
      %p122 = scmp.ne.s32.totalorder %s117, %s119
      %p123 = scmp.eq.s32.totalorder %s22, 0
      %p124 = por %p122, %p123
      %p125 = scmp.ne.s32.totalorder %s117, %s119
      %p126 = scmp.eq.s32.totalorder %s27, 1
      %p127 = por %p125, %p126
      %p128 = scmp.ne.s32.totalorder %s119, %s120
      %p129 = scmp.eq.s32.totalorder %s27, 0
      %p130 = por %p128, %p129
      %p131 = scmp.ne.s32.totalorder %s119, %s120
      %p132 = scmp.eq.s32.totalorder %s28, 1
      %p133 = por %p131, %p132
      %p135 = scmp.ne.s32.totalorder %s120, %s134
      %p136 = scmp.eq.s32.totalorder %s28, 0
      %p137 = por %p135, %p136
      %s139 = sadd.s32 %s138, 1
      %p142 = scmp.eq.s32.totalorder %s22, 1
      %p143 = scmp.ne.s32.totalorder %s138, %s140
      %p144 = scmp.eq.s32.totalorder %s22, 0
      %p145 = por %p143, %p144
      %p146 = scmp.ne.s32.totalorder %s138, %s140
      %p147 = scmp.eq.s32.totalorder %s27, 1
      %p148 = por %p146, %p147
      %p149 = scmp.ne.s32.totalorder %s140, %s141
      %p150 = scmp.eq.s32.totalorder %s27, 0
      %p151 = por %p149, %p150
      %p152 = scmp.ne.s32.totalorder %s140, %s141
      %p153 = scmp.eq.s32.totalorder %s28, 1
      %p154 = por %p152, %p153
      %p156 = scmp.ne.s32.totalorder %s141, %s155
      %p157 = scmp.eq.s32.totalorder %s28, 0
      %p158 = por %p156, %p157
      %s160 = sadd.s32 %s159, 1
      %p163 = scmp.eq.s32.totalorder %s22, 1
      %p164 = scmp.ne.s32.totalorder %s159, %s161
      %p165 = scmp.eq.s32.totalorder %s22, 0
      %p166 = por %p164, %p165
      %p167 = scmp.ne.s32.totalorder %s159, %s161
      %p168 = scmp.eq.s32.totalorder %s27, 1
      %p169 = por %p167, %p168
      %p170 = scmp.ne.s32.totalorder %s161, %s162
      %p171 = scmp.eq.s32.totalorder %s27, 0
      %p172 = por %p170, %p171
      %p173 = scmp.ne.s32.totalorder %s161, %s162
      %p174 = scmp.eq.s32.totalorder %s28, 1
      %p175 = por %p173, %p174
      %p177 = scmp.ne.s32.totalorder %s162, %s176
      %p178 = scmp.eq.s32.totalorder %s28, 0
      %p179 = por %p177, %p178
      %s180 = ssub.s32 %s29, %s41
      %s181 = ssub.s32 %s30, %s37
      %s182 = sor.u32 %s180, %s181
      %p183 = scmp.eq.s32.totalorder %s182, 0
      %s185 = sadd.s32 %s184, 1
      %s186 = scalar_select %p183, %s184, %s185
      %p189 = pneg %p183
      %p190 = scmp.eq.s32.totalorder %s22, 1
      %p191 = por %p189, %p190
      %p192 = scmp.ne.s32.totalorder %s184, %s187
      %p193 = scmp.eq.s32.totalorder %s22, 0
      %p194 = por %p192, %p193
      %p195 = scmp.ne.s32.totalorder %s184, %s187
      %p196 = scmp.eq.s32.totalorder %s27, 1
      %p197 = por %p195, %p196
      %p198 = scmp.ne.s32.totalorder %s187, %s188
      %p199 = scmp.eq.s32.totalorder %s27, 0
      %p200 = por %p198, %p199
      %p201 = scmp.ne.s32.totalorder %s187, %s188
      %p202 = scmp.eq.s32.totalorder %s28, 1
      %p203 = por %p201, %p202
      %p205 = scmp.ne.s32.totalorder %s188, %s204
      %p206 = scmp.eq.s32.totalorder %s28, 0
      %p207 = por %p205, %p206
      %p208 = scmp.le.s32.totalorder 1, %s22
      %p209 = scmp.lt.s32.totalorder %s22, 3
      %p210 = pnand %p208, %p209
      %p211 = pneg %p210
      // Predicated region
      $region9: #{tpu_custom_call.1} parent=5 // pred_check
        _
      $region10: #{tpu_custom_call.1} parent=5 // pred_check_branch
        %213 = sbr.rel (%p210) target = $region12
      $region11: #{tpu_custom_call.1} parent=5 // pred_region
        %s214 = ssub.s32 %s22, 1
        // Predicated region
        $region13: #{tpu_custom_call.1} parent=11 // pred_check
          %p215 = pneg %p109
        $region14: #{tpu_custom_call.1} parent=11 // pred_check_branch
          %217 = sbr.rel (%p215) target = $region16
        $region15: #{tpu_custom_call.1} parent=11 // pred_region
          %s219 = ssub.s32 512, 512
          %220 = vsyncadd [#allocation6], %s219
          %s221 = sshll.u32 [#allocation7], 4
          %s222 = int_to_ptr.vmem [resolvable:$true] %s221
          %227 = dma.hbm_to_vmem [thread:$0]  %s2, 512, %s222, [#allocation6], 128, 128, 8
        $region16: #{tpu_custom_call.1} parent=11 // pred_fallthru
          _
        // Predicated region
        $region17: #{tpu_custom_call.1} parent=11 // pred_check
          %p228 = pneg %p130
        $region18: #{tpu_custom_call.1} parent=11 // pred_check_branch
          %230 = sbr.rel (%p228) target = $region20
        $region19: #{tpu_custom_call.1} parent=11 // pred_region
          %s232 = ssub.s32 512, 512
          %233 = vsyncadd [#allocation9], %s232
          %s234 = sshll.u32 [#allocation8], 4
          %s235 = int_to_ptr.vmem [resolvable:$true] %s234
          %240 = dma.hbm_to_vmem [thread:$0]  %s3, 512, %s235, [#allocation9], 128, 128, 8
        $region20: #{tpu_custom_call.1} parent=11 // pred_fallthru
          _
        // Predicated region
        $region21: #{tpu_custom_call.1} parent=11 // pred_check
          %p241 = pneg %p151
        $region22: #{tpu_custom_call.1} parent=11 // pred_check_branch
          %243 = sbr.rel (%p241) target = $region24
        $region23: #{tpu_custom_call.1} parent=11 // pred_region
          %s245 = ssub.s32 512, 512
          %246 = vsyncadd [#allocation9], %s245
          %s247 = sshll.u32 [#allocation10], 4
          %s248 = int_to_ptr.vmem [resolvable:$true] %s247
          %253 = dma.hbm_to_vmem [thread:$0]  %s4, 512, %s248, [#allocation9], 128, 128, 8
        $region24: #{tpu_custom_call.1} parent=11 // pred_fallthru
          _
        // Predicated region
        $region25: #{tpu_custom_call.1} parent=11 // pred_check
          %p254 = pneg %p172
        $region26: #{tpu_custom_call.1} parent=11 // pred_check_branch
          %256 = sbr.rel (%p254) target = $region28
        $region27: #{tpu_custom_call.1} parent=11 // pred_region
          _
        $region28: #{tpu_custom_call.1} parent=11 // pred_fallthru
          _
      $region12: #{tpu_custom_call.1} parent=5 // pred_fallthru
        _
      %p257 = scmp.lt.s32.totalorder %s22, 2
      // Predicated region
      $region29: #{tpu_custom_call.1} parent=5 // pred_check
        %p258 = pneg %p257
      $region30: #{tpu_custom_call.1} parent=5 // pred_check_branch
        %260 = sbr.rel (%p258) target = $region32
      $region31: #{tpu_custom_call.1} parent=5 // pred_region
        // Predicated region
        $region33: #{tpu_custom_call.1} parent=31 // pred_check
          %p261 = pneg %p56
        $region34: #{tpu_custom_call.1} parent=31 // pred_check_branch
          %263 = sbr.rel (%p261) target = $region36
        $region35: #{tpu_custom_call.1} parent=31 // pred_region
          %s264 = sand.u32 %s46, 1
          %s265 = scalar_lea.sflag [#allocation3], %s264
          %s266 = sand.u32 %s46, 1
          %s267 = smul.addr %s266, 8
          %s268 = scalar_lea.vmem [#allocation2], %s267
          %s270 = ssub.s32 128, 128
          %271 = vsyncadd %s265, %s270
          %s272 = sadd.s32 %s30, %s29
          %s273 = smul.addr %s272, 128
          %s274 = scalar_lea.hbm %s0, %s273
          %s276 = sshll.u32 %s268, 4
          %s277 = int_to_ptr.vmem [resolvable:$true] %s276
          %279 = dma.hbm_to_vmem [thread:$0]  %s274, 128, %s277, %s265
        $region36: #{tpu_custom_call.1} parent=31 // pred_fallthru
          _
        // Predicated region
        $region37: #{tpu_custom_call.1} parent=31 // pred_check
          %p280 = pneg %p82
        $region38: #{tpu_custom_call.1} parent=31 // pred_check_branch
          %282 = sbr.rel (%p280) target = $region40
        $region39: #{tpu_custom_call.1} parent=31 // pred_region
          %s283 = sand.u32 %s22, 1
          %s284 = scalar_lea.sflag [#allocation6], %s283
          %s285 = sand.u32 %s72, 1
          %s286 = smul.addr %s285, 8
          %s287 = scalar_lea.vmem [#allocation5], %s286
          %s289 = ssub.s32 128, 128
          %290 = vsyncadd %s284, %s289
          %s291 = smul.addr %s29, 128
          %s292 = scalar_lea.hbm %s1, %s291
          %s294 = sshll.u32 %s287, 4
          %s295 = int_to_ptr.vmem [resolvable:$true] %s294
          %297 = dma.hbm_to_vmem [thread:$0]  %s292, 128, %s295, %s284
        $region40: #{tpu_custom_call.1} parent=31 // pred_fallthru
          _
      $region32: #{tpu_custom_call.1} parent=5 // pred_fallthru
        _
      %p298 = scmp.le.s32.totalorder 1, %s22
      %p299 = scmp.lt.s32.totalorder %s22, 3
      %p300 = pnand %p298, %p299
      %p301 = pneg %p300
      // Predicated region
      $region41: #{tpu_custom_call.1} parent=5 // pred_check
        _
      $region42: #{tpu_custom_call.1} parent=5 // pred_check_branch
        %303 = sbr.rel (%p300) target = $region44
      $region43: #{tpu_custom_call.1} parent=5 // pred_region
        %s304 = ssub.s32 %s22, 1
        %s305 = sand.u32 %s49, 1
        %s306 = scalar_lea.sflag [#allocation3], %s305
        %s307 = sand.u32 %s49, 1
        %s308 = smul.addr %s307, 8
        %s309 = scalar_lea.vmem [#allocation2], %s308
        // Predicated region
        $region45: #{tpu_custom_call.1} parent=43 // pred_check
          %p310 = pneg %p62
        $region46: #{tpu_custom_call.1} parent=43 // pred_check_branch
          %312 = sbr.rel (%p310) target = $region48
        $region47: #{tpu_custom_call.1} parent=43 // pred_region
          %313 = dma.done %s306, 128
        $region48: #{tpu_custom_call.1} parent=43 // pred_fallthru
          _
        %s314 = sand.u32 %s27, 1
        %s315 = scalar_lea.sflag [#allocation6], %s314
        %s316 = sand.u32 %s75, 1
        %s317 = smul.addr %s316, 8
        %s318 = scalar_lea.vmem [#allocation5], %s317
        // Predicated region
        $region49: #{tpu_custom_call.1} parent=43 // pred_check
          %p319 = pneg %p88
        $region50: #{tpu_custom_call.1} parent=43 // pred_check_branch
          %321 = sbr.rel (%p319) target = $region52
        $region51: #{tpu_custom_call.1} parent=43 // pred_region
          %322 = dma.done %s315, 128
        $region52: #{tpu_custom_call.1} parent=43 // pred_fallthru
          _
        // Predicated region
        $region53: #{tpu_custom_call.1} parent=43 // pred_check
          %p323 = pneg %p109
        $region54: #{tpu_custom_call.1} parent=43 // pred_check_branch
          %325 = sbr.rel (%p323) target = $region56
        $region55: #{tpu_custom_call.1} parent=43 // pred_region
          %326 = dma.done [#allocation6], 512
        $region56: #{tpu_custom_call.1} parent=43 // pred_fallthru
          _
        // Predicated region
        $region57: #{tpu_custom_call.1} parent=43 // pred_check
          %p327 = pneg %p130
        $region58: #{tpu_custom_call.1} parent=43 // pred_check_branch
          %329 = sbr.rel (%p327) target = $region60
        $region59: #{tpu_custom_call.1} parent=43 // pred_region
          %330 = dma.done [#allocation9], 512
        $region60: #{tpu_custom_call.1} parent=43 // pred_fallthru
          _
        // Predicated region
        $region61: #{tpu_custom_call.1} parent=43 // pred_check
          %p331 = pneg %p151
        $region62: #{tpu_custom_call.1} parent=43 // pred_check_branch
          %333 = sbr.rel (%p331) target = $region64
        $region63: #{tpu_custom_call.1} parent=43 // pred_region
          %334 = dma.done [#allocation9], 512
        $region64: #{tpu_custom_call.1} parent=43 // pred_fallthru
          _
        %s335 = sand.u32 %s49, 1
        %s336 = scalar_lea.sflag [#allocation3], %s335
        %s337 = sand.u32 %s49, 1
        %s338 = smul.addr %s337, 8
        %s339 = scalar_lea.vmem [#allocation2], %s338
        %p340 = pneg %p62
        %p341 = pneg %p59
        %s342 = sand.u32 %s27, 1
        %s343 = scalar_lea.sflag [#allocation6], %s342
        %s344 = sand.u32 %s75, 1
        %s345 = smul.addr %s344, 8
        %s346 = scalar_lea.vmem [#allocation5], %s345
        %p347 = pneg %p88
        %p348 = pneg %p85
        %p349 = pneg %p109
        %p350 = pneg %p106
        %p351 = pneg %p130
        %p352 = pneg %p127
        %p353 = pneg %p151
        %p354 = pneg %p148
        %p355 = pneg %p172
        %p356 = pneg %p169
        %p357 = pneg %p200
        %p358 = pneg %p197
        %s359 = sand.u32 %s187, 1
        %s360 = scalar_lea.sflag [#allocation4], %s359
        %s361 = sand.u32 %s187, 1
        %s362 = smul.addr %s361, 8
        %s363 = scalar_lea.vmem [#allocation11], %s362
        %v364 = vld [vmem:[%s309] sm:$0xff]
        %v365 = vld [vmem:[%s318] sm:$0xff]
        %v366 = vld [vmem:[#allocation7] sm:$0xff]
        %v367 = vld [vmem:[#allocation7 + $0x8] sm:$0xff]
        %v368 = vld [vmem:[#allocation7 + $0x10] sm:$0xff]
        %v369 = vld [vmem:[#allocation7 + $0x18] sm:$0xff]
        %vm370 = vcmask 261120
        %v372 = vsel %vm370, %v364, 0
        %374 = vmatprep.subr.mxu0 0.0
        %375 = vmatpush1.msra.mxu0 %v366
        %376 = vmatprep.subr.mxu0 0.0
        %377 = vmatpush1.msra.mxu0 %v367
        %378 = vmatprep.subr.mxu0 0.0
        %379 = vmatpush1.msra.mxu0 %v368
        %380 = vmatprep.subr.mxu0 0.0
        %381 = vmatpush1.msra.mxu0 %v369
        %382 = vmatprep.subr.mxu0 0.0
        %383 = vmatpush1.msra.mxu0 0.0
        %384 = vmatprep.subr.mxu0 0.0
        %385 = vmatpush1.msra.mxu0 0.0
        %386 = vmatprep.subr.mxu0 0.0
        %387 = vmatpush1.msra.mxu0 0.0
        %388 = vmatprep.subr.mxu0 0.0
        %389 = vmatpush1.msra.mxu0 0.0
        %390 = vmatprep.subr.mxu0 0.0
        %391 = vmatpush1.msra.mxu0 0.0
        %392 = vmatprep.subr.mxu0 0.0
        %393 = vmatpush1.msra.mxu0 0.0
        %394 = vmatprep.subr.mxu0 0.0
        %395 = vmatpush1.msra.mxu0 0.0
        %396 = vmatprep.subr.mxu0 0.0
        %397 = vmatpush1.msra.mxu0 0.0
        %398 = vmatprep.subr.mxu0 0.0
        %399 = vmatpush1.msra.mxu0 0.0
        %400 = vmatprep.subr.mxu0 0.0
        %401 = vmatpush1.msra.mxu0 0.0
        %402 = vmatprep.subr.mxu0 0.0
        %403 = vmatpush1.msra.mxu0 0.0
        %404 = vmatprep.subr.mxu0 0.0
        %405 = vmatpush1.msra.mxu0 0.0
        %406 = vmatprep.subr.mxu0 0.0
        %407 = vmatpush1.msra.mxu0 0.0
        %408 = vmatprep.subr.mxu0 0.0
        %409 = vmatpush1.msra.mxu0 0.0
        %410 = vmatprep.subr.mxu0 0.0
        %411 = vmatpush1.msra.mxu0 0.0
        %412 = vmatprep.subr.mxu0 0.0
        %413 = vmatpush1.msra.mxu0 0.0
        %414 = vmatprep.subr.mxu0 0.0
        %415 = vmatpush1.msra.mxu0 0.0
        %416 = vmatprep.subr.mxu0 0.0
        %417 = vmatpush1.msra.mxu0 0.0
        %418 = vmatprep.subr.mxu0 0.0
        %419 = vmatpush1.msra.mxu0 0.0
        %420 = vmatprep.subr.mxu0 0.0
        %421 = vmatpush1.msra.mxu0 0.0
        %422 = vmatprep.subr.mxu0 0.0
        %423 = vmatpush1.msra.mxu0 0.0
        %424 = vmatprep.subr.mxu0 0.0
        %425 = vmatpush1.msra.mxu0 0.0
        %426 = vmatprep.subr.mxu0 0.0
        %427 = vmatpush1.msra.mxu0 0.0
        %428 = vmatprep.subr.mxu0 0.0
        %429 = vmatpush1.msra.mxu0 0.0
        %430 = vmatprep.subr.mxu0 0.0
        %431 = vmatpush1.msra.mxu0 0.0
        %432 = vmatprep.subr.mxu0 0.0
        %433 = vmatpush1.msra.mxu0 0.0
        %434 = vmatprep.subr.mxu0 0.0
        %435 = vmatpush1.msra.mxu0 0.0
        %436 = vmatprep.subr.mxu0 0.0
        %437 = vmatpush1.msra.mxu0 0.0
        %438 = vmatprep.mubr.f32.mxu0 0.0
        %439 = vmatmul.mubr.f32.gmra.mrb[0].mxu0 %v372
        %v440 = vpop.f32.mrb[0].mxu0
        %v441 = vadd.f32 0.0, %v440
        %v442 = vpop.f32.mrb[0].mxu0
        %443 = vdwg.mxu0
        %v444 = vmul.f32 %v441, 0.25
        %v445 = vld [vmem:[#allocation8] sm:$0xff]
        %v446 = vld [vmem:[#allocation8 + $0x8] sm:$0xff]
        %v447 = vld [vmem:[#allocation8 + $0x10] sm:$0xff]
        %v448 = vld [vmem:[#allocation8 + $0x18] sm:$0xff]
        %v450 = vsel %vm370, %v365, 0
        %452 = vmatprep.subr.mxu0 0.0
        %453 = vmatpush1.msra.mxu0 %v445
        %454 = vmatprep.subr.mxu0 0.0
        %455 = vmatpush1.msra.mxu0 %v446
        %456 = vmatprep.subr.mxu0 0.0
        %457 = vmatpush1.msra.mxu0 %v447
        %458 = vmatprep.subr.mxu0 0.0
        %459 = vmatpush1.msra.mxu0 %v448
        %460 = vmatprep.subr.mxu0 0.0
        %461 = vmatpush1.msra.mxu0 0.0
        %462 = vmatprep.subr.mxu0 0.0
        %463 = vmatpush1.msra.mxu0 0.0
        %464 = vmatprep.subr.mxu0 0.0
        %465 = vmatpush1.msra.mxu0 0.0
        %466 = vmatprep.subr.mxu0 0.0
        %467 = vmatpush1.msra.mxu0 0.0
        %468 = vmatprep.subr.mxu0 0.0
        %469 = vmatpush1.msra.mxu0 0.0
        %470 = vmatprep.subr.mxu0 0.0
        %471 = vmatpush1.msra.mxu0 0.0
        %472 = vmatprep.subr.mxu0 0.0
        %473 = vmatpush1.msra.mxu0 0.0
        %474 = vmatprep.subr.mxu0 0.0
        %475 = vmatpush1.msra.mxu0 0.0
        %476 = vmatprep.subr.mxu0 0.0
        %477 = vmatpush1.msra.mxu0 0.0
        %478 = vmatprep.subr.mxu0 0.0
        %479 = vmatpush1.msra.mxu0 0.0
        %480 = vmatprep.subr.mxu0 0.0
        %481 = vmatpush1.msra.mxu0 0.0
        %482 = vmatprep.subr.mxu0 0.0
        %483 = vmatpush1.msra.mxu0 0.0
        %484 = vmatprep.subr.mxu0 0.0
        %485 = vmatpush1.msra.mxu0 0.0
        %486 = vmatprep.subr.mxu0 0.0
        %487 = vmatpush1.msra.mxu0 0.0
        %488 = vmatprep.subr.mxu0 0.0
        %489 = vmatpush1.msra.mxu0 0.0
        %490 = vmatprep.subr.mxu0 0.0
        %491 = vmatpush1.msra.mxu0 0.0
        %492 = vmatprep.subr.mxu0 0.0
        %493 = vmatpush1.msra.mxu0 0.0
        %494 = vmatprep.subr.mxu0 0.0
        %495 = vmatpush1.msra.mxu0 0.0
        %496 = vmatprep.subr.mxu0 0.0
        %497 = vmatpush1.msra.mxu0 0.0
        %498 = vmatprep.subr.mxu0 0.0
        %499 = vmatpush1.msra.mxu0 0.0
        %500 = vmatprep.subr.mxu0 0.0
        %501 = vmatpush1.msra.mxu0 0.0
        %502 = vmatprep.subr.mxu0 0.0
        %503 = vmatpush1.msra.mxu0 0.0
        %504 = vmatprep.subr.mxu0 0.0
        %505 = vmatpush1.msra.mxu0 0.0
        %506 = vmatprep.subr.mxu0 0.0
        %507 = vmatpush1.msra.mxu0 0.0
        %508 = vmatprep.subr.mxu0 0.0
        %509 = vmatpush1.msra.mxu0 0.0
        %510 = vmatprep.subr.mxu0 0.0
        %511 = vmatpush1.msra.mxu0 0.0
        %512 = vmatprep.subr.mxu0 0.0
        %513 = vmatpush1.msra.mxu0 0.0
        %514 = vmatprep.subr.mxu0 0.0
        %515 = vmatpush1.msra.mxu0 0.0
        %516 = vmatprep.mubr.f32.mxu0 0.0
        %517 = vmatmul.mubr.f32.gmra.mrb[0].mxu0 %v450
        %v518 = vpop.f32.mrb[0].mxu0
        %v519 = vadd.f32 0.0, %v518
        %v520 = vpop.f32.mrb[0].mxu0
        %521 = vdwg.mxu0
        %vm522 = vcmask 130048
        %v524 = vsel %vm522, %v444, 0
        %v527 = vsel %vm522, %v519, 0
        %529 = vmatprep.subr.mxu0 0.0
        %530 = vmatpush1.xpose.msra.mxu0 %v527
        %531 = vmatprep.subr.mxu0 0.0
        %532 = vmatpush1.xpose.msra.mxu0 0.0
        %533 = vmatprep.subr.mxu0 0.0
        %534 = vmatpush1.xpose.msra.mxu0 0.0
        %535 = vmatprep.subr.mxu0 0.0
        %536 = vmatpush1.xpose.msra.mxu0 0.0
        %537 = vmatprep.subr.mxu0 0.0
        %538 = vmatpush1.xpose.msra.mxu0 0.0
        %539 = vmatprep.subr.mxu0 0.0
        %540 = vmatpush1.xpose.msra.mxu0 0.0
        %541 = vmatprep.subr.mxu0 0.0
        %542 = vmatpush1.xpose.msra.mxu0 0.0
        %543 = vmatprep.subr.mxu0 0.0
        %544 = vmatpush1.xpose.msra.mxu0 0.0
        %545 = vmatprep.subr.mxu0 0.0
        %546 = vmatpush1.xpose.msra.mxu0 0.0
        %547 = vmatprep.subr.mxu0 0.0
        %548 = vmatpush1.xpose.msra.mxu0 0.0
        %549 = vmatprep.subr.mxu0 0.0
        %550 = vmatpush1.xpose.msra.mxu0 0.0
        %551 = vmatprep.subr.mxu0 0.0
        %552 = vmatpush1.xpose.msra.mxu0 0.0
        %553 = vmatprep.subr.mxu0 0.0
        %554 = vmatpush1.xpose.msra.mxu0 0.0
        %555 = vmatprep.subr.mxu0 0.0
        %556 = vmatpush1.xpose.msra.mxu0 0.0
        %557 = vmatprep.subr.mxu0 0.0
        %558 = vmatpush1.xpose.msra.mxu0 0.0
        %559 = vmatprep.subr.mxu0 0.0
        %560 = vmatpush1.xpose.msra.mxu0 0.0
        %561 = vmatprep.subr.mxu0 0.0
        %562 = vmatpush1.xpose.msra.mxu0 0.0
        %563 = vmatprep.subr.mxu0 0.0
        %564 = vmatpush1.xpose.msra.mxu0 0.0
        %565 = vmatprep.subr.mxu0 0.0
        %566 = vmatpush1.xpose.msra.mxu0 0.0
        %567 = vmatprep.subr.mxu0 0.0
        %568 = vmatpush1.xpose.msra.mxu0 0.0
        %569 = vmatprep.subr.mxu0 0.0
        %570 = vmatpush1.xpose.msra.mxu0 0.0
        %571 = vmatprep.subr.mxu0 0.0
        %572 = vmatpush1.xpose.msra.mxu0 0.0
        %573 = vmatprep.subr.mxu0 0.0
        %574 = vmatpush1.xpose.msra.mxu0 0.0
        %575 = vmatprep.subr.mxu0 0.0
        %576 = vmatpush1.xpose.msra.mxu0 0.0
        %577 = vmatprep.subr.mxu0 0.0
        %578 = vmatpush1.xpose.msra.mxu0 0.0
        %579 = vmatprep.subr.mxu0 0.0
        %580 = vmatpush1.xpose.msra.mxu0 0.0
        %581 = vmatprep.subr.mxu0 0.0
        %582 = vmatpush1.xpose.msra.mxu0 0.0
        %583 = vmatprep.subr.mxu0 0.0
        %584 = vmatpush1.xpose.msra.mxu0 0.0
        %585 = vmatprep.subr.mxu0 0.0
        %586 = vmatpush1.xpose.msra.mxu0 0.0
        %587 = vmatprep.subr.mxu0 0.0
        %588 = vmatpush1.xpose.msra.mxu0 0.0
        %589 = vmatprep.subr.mxu0 0.0
        %590 = vmatpush1.xpose.msra.mxu0 0.0
        %591 = vmatprep.subr.mxu0 0.0
        %592 = vmatpush1.xpose.msra.mxu0 0.0
        %593 = vmatprep.mubr.f32.mxu0 0.0
        %594 = vmatmul.mubr.f32.gmra.mrb[0].mxu0 %v524
        %v595 = vpop.f32.mrb[0].mxu0
        %v596 = vadd.f32 0.0, %v595
        %v597 = vpop.f32.mrb[0].mxu0
        %598 = vdwg.mxu0
        %vm599 = vcmask 64512
        %v600 = vsel %vm599, %v596, -inf
        %601 = vmax.xlane.f32.xlu0 %v600
        %v602 = vpop.xlane.xlu0 %601
        %v603 = vsub.f32 %v596, %v602
        %v604 = vmul.f32 %v603, 1.442695
        %v605 = vpow.pop %v604
        %v606 = vsel %vm599, %v605, 0.0
        %607 = vadd.xlane.f32.xlu0 %v606
        %v608 = vpop.xlane.xlu0 %607
        %v609 = vrcp.pop %v608
        %v610 = vmul.f32 %v605, %v609
        %611 = vrot.lane.b32.xlu0 %v519, 96
        %v612 = vpop.permute.xlu0 %611
        %v615 = vsel %vm599, %v610, 0
        %617 = vmatprep.subr.mxu0 0.0
        %618 = vmatpush1.msra.mxu0 %v612
        %619 = vmatprep.subr.mxu0 0.0
        %620 = vmatpush1.msra.mxu0 0.0
        %621 = vmatprep.subr.mxu0 0.0
        %622 = vmatpush1.msra.mxu0 0.0
        %623 = vmatprep.subr.mxu0 0.0
        %624 = vmatpush1.msra.mxu0 0.0
        %625 = vmatprep.subr.mxu0 0.0
        %626 = vmatpush1.msra.mxu0 0.0
        %627 = vmatprep.subr.mxu0 0.0
        %628 = vmatpush1.msra.mxu0 0.0
        %629 = vmatprep.subr.mxu0 0.0
        %630 = vmatpush1.msra.mxu0 0.0
        %631 = vmatprep.subr.mxu0 0.0
        %632 = vmatpush1.msra.mxu0 0.0
        %633 = vmatprep.subr.mxu0 0.0
        %634 = vmatpush1.msra.mxu0 0.0
        %635 = vmatprep.subr.mxu0 0.0
        %636 = vmatpush1.msra.mxu0 0.0
        %637 = vmatprep.subr.mxu0 0.0
        %638 = vmatpush1.msra.mxu0 0.0
        %639 = vmatprep.subr.mxu0 0.0
        %640 = vmatpush1.msra.mxu0 0.0
        %641 = vmatprep.subr.mxu0 0.0
        %642 = vmatpush1.msra.mxu0 0.0
        %643 = vmatprep.subr.mxu0 0.0
        %644 = vmatpush1.msra.mxu0 0.0
        %645 = vmatprep.subr.mxu0 0.0
        %646 = vmatpush1.msra.mxu0 0.0
        %647 = vmatprep.subr.mxu0 0.0
        %648 = vmatpush1.msra.mxu0 0.0
        %649 = vmatprep.subr.mxu0 0.0
        %650 = vmatpush1.msra.mxu0 0.0
        %651 = vmatprep.subr.mxu0 0.0
        %652 = vmatpush1.msra.mxu0 0.0
        %653 = vmatprep.subr.mxu0 0.0
        %654 = vmatpush1.msra.mxu0 0.0
        %655 = vmatprep.subr.mxu0 0.0
        %656 = vmatpush1.msra.mxu0 0.0
        %657 = vmatprep.subr.mxu0 0.0
        %658 = vmatpush1.msra.mxu0 0.0
        %659 = vmatprep.subr.mxu0 0.0
        %660 = vmatpush1.msra.mxu0 0.0
        %661 = vmatprep.subr.mxu0 0.0
        %662 = vmatpush1.msra.mxu0 0.0
        %663 = vmatprep.subr.mxu0 0.0
        %664 = vmatpush1.msra.mxu0 0.0
        %665 = vmatprep.subr.mxu0 0.0
        %666 = vmatpush1.msra.mxu0 0.0
        %667 = vmatprep.subr.mxu0 0.0
        %668 = vmatpush1.msra.mxu0 0.0
        %669 = vmatprep.subr.mxu0 0.0
        %670 = vmatpush1.msra.mxu0 0.0
        %671 = vmatprep.subr.mxu0 0.0
        %672 = vmatpush1.msra.mxu0 0.0
        %673 = vmatprep.subr.mxu0 0.0
        %674 = vmatpush1.msra.mxu0 0.0
        %675 = vmatprep.subr.mxu0 0.0
        %676 = vmatpush1.msra.mxu0 0.0
        %677 = vmatprep.subr.mxu0 0.0
        %678 = vmatpush1.msra.mxu0 0.0
        %679 = vmatprep.subr.mxu0 0.0
        %680 = vmatpush1.msra.mxu0 0.0
        %681 = vmatprep.mubr.f32.mxu0 0.0
        %682 = vmatmul.mubr.f32.gmra.mrb[0].mxu0 %v615
        %v683 = vpop.f32.mrb[0].mxu0
        %v684 = vadd.f32 0.0, %v683
        %v685 = vpop.f32.mrb[0].mxu0
        %686 = vdwg.mxu0
        %687 = vrot.lane.b32.xlu0 %v444, 112
        %v688 = vpop.permute.xlu0 %687
        %689 = vrot.lane.b32.xlu0 %v519, 112
        %v690 = vpop.permute.xlu0 %689
        %v691 = vsel %vm522, %v688, 0
        %v693 = vsel %vm522, %v690, 0
        %695 = vmatprep.subr.mxu0 0.0
        %696 = vmatpush1.xpose.msra.mxu0 %v693
        %697 = vmatprep.subr.mxu0 0.0
        %698 = vmatpush1.xpose.msra.mxu0 0.0
        %699 = vmatprep.subr.mxu0 0.0
        %700 = vmatpush1.xpose.msra.mxu0 0.0
        %701 = vmatprep.subr.mxu0 0.0
        %702 = vmatpush1.xpose.msra.mxu0 0.0
        %703 = vmatprep.subr.mxu0 0.0
        %704 = vmatpush1.xpose.msra.mxu0 0.0
        %705 = vmatprep.subr.mxu0 0.0
        %706 = vmatpush1.xpose.msra.mxu0 0.0
        %707 = vmatprep.subr.mxu0 0.0
        %708 = vmatpush1.xpose.msra.mxu0 0.0
        %709 = vmatprep.subr.mxu0 0.0
        %710 = vmatpush1.xpose.msra.mxu0 0.0
        %711 = vmatprep.subr.mxu0 0.0
        %712 = vmatpush1.xpose.msra.mxu0 0.0
        %713 = vmatprep.subr.mxu0 0.0
        %714 = vmatpush1.xpose.msra.mxu0 0.0
        %715 = vmatprep.subr.mxu0 0.0
        %716 = vmatpush1.xpose.msra.mxu0 0.0
        %717 = vmatprep.subr.mxu0 0.0
        %718 = vmatpush1.xpose.msra.mxu0 0.0
        %719 = vmatprep.subr.mxu0 0.0
        %720 = vmatpush1.xpose.msra.mxu0 0.0
        %721 = vmatprep.subr.mxu0 0.0
        %722 = vmatpush1.xpose.msra.mxu0 0.0
        %723 = vmatprep.subr.mxu0 0.0
        %724 = vmatpush1.xpose.msra.mxu0 0.0
        %725 = vmatprep.subr.mxu0 0.0
        %726 = vmatpush1.xpose.msra.mxu0 0.0
        %727 = vmatprep.subr.mxu0 0.0
        %728 = vmatpush1.xpose.msra.mxu0 0.0
        %729 = vmatprep.subr.mxu0 0.0
        %730 = vmatpush1.xpose.msra.mxu0 0.0
        %731 = vmatprep.subr.mxu0 0.0
        %732 = vmatpush1.xpose.msra.mxu0 0.0
        %733 = vmatprep.subr.mxu0 0.0
        %734 = vmatpush1.xpose.msra.mxu0 0.0
        %735 = vmatprep.subr.mxu0 0.0
        %736 = vmatpush1.xpose.msra.mxu0 0.0
        %737 = vmatprep.subr.mxu0 0.0
        %738 = vmatpush1.xpose.msra.mxu0 0.0
        %739 = vmatprep.subr.mxu0 0.0
        %740 = vmatpush1.xpose.msra.mxu0 0.0
        %741 = vmatprep.subr.mxu0 0.0
        %742 = vmatpush1.xpose.msra.mxu0 0.0
        %743 = vmatprep.subr.mxu0 0.0
        %744 = vmatpush1.xpose.msra.mxu0 0.0
        %745 = vmatprep.subr.mxu0 0.0
        %746 = vmatpush1.xpose.msra.mxu0 0.0
        %747 = vmatprep.subr.mxu0 0.0
        %748 = vmatpush1.xpose.msra.mxu0 0.0
        %749 = vmatprep.subr.mxu0 0.0
        %750 = vmatpush1.xpose.msra.mxu0 0.0
        %751 = vmatprep.subr.mxu0 0.0
        %752 = vmatpush1.xpose.msra.mxu0 0.0
        %753 = vmatprep.subr.mxu0 0.0
        %754 = vmatpush1.xpose.msra.mxu0 0.0
        %755 = vmatprep.subr.mxu0 0.0
        %756 = vmatpush1.xpose.msra.mxu0 0.0
        %757 = vmatprep.subr.mxu0 0.0
        %758 = vmatpush1.xpose.msra.mxu0 0.0
        %759 = vmatprep.mubr.f32.mxu0 0.0
        %760 = vmatmul.mubr.f32.gmra.mrb[0].mxu0 %v691
        %v761 = vpop.f32.mrb[0].mxu0
        %v762 = vadd.f32 0.0, %v761
        %v763 = vpop.f32.mrb[0].mxu0
        %764 = vdwg.mxu0
        %v765 = vsel %vm599, %v762, -inf
        %766 = vmax.xlane.f32.xlu0 %v765
        %v767 = vpop.xlane.xlu0 %766
        %v768 = vsub.f32 %v762, %v767
        %v769 = vmul.f32 %v768, 1.442695
        %v770 = vpow.pop %v769
        %v771 = vsel %vm599, %v770, 0.0
        %772 = vadd.xlane.f32.xlu0 %v771
        %v773 = vpop.xlane.xlu0 %772
        %v774 = vrcp.pop %v773
        %v775 = vmul.f32 %v770, %v774
        %776 = vrot.lane.b32.xlu0 %v519, 80
        %v777 = vpop.permute.xlu0 %776
        %v780 = vsel %vm599, %v775, 0
        %782 = vmatprep.subr.mxu0 0.0
        %783 = vmatpush1.msra.mxu0 %v777
        %784 = vmatprep.subr.mxu0 0.0
        %785 = vmatpush1.msra.mxu0 0.0
        %786 = vmatprep.subr.mxu0 0.0
        %787 = vmatpush1.msra.mxu0 0.0
        %788 = vmatprep.subr.mxu0 0.0
        %789 = vmatpush1.msra.mxu0 0.0
        %790 = vmatprep.subr.mxu0 0.0
        %791 = vmatpush1.msra.mxu0 0.0
        %792 = vmatprep.subr.mxu0 0.0
        %793 = vmatpush1.msra.mxu0 0.0
        %794 = vmatprep.subr.mxu0 0.0
        %795 = vmatpush1.msra.mxu0 0.0
        %796 = vmatprep.subr.mxu0 0.0
        %797 = vmatpush1.msra.mxu0 0.0
        %798 = vmatprep.subr.mxu0 0.0
        %799 = vmatpush1.msra.mxu0 0.0
        %800 = vmatprep.subr.mxu0 0.0
        %801 = vmatpush1.msra.mxu0 0.0
        %802 = vmatprep.subr.mxu0 0.0
        %803 = vmatpush1.msra.mxu0 0.0
        %804 = vmatprep.subr.mxu0 0.0
        %805 = vmatpush1.msra.mxu0 0.0
        %806 = vmatprep.subr.mxu0 0.0
        %807 = vmatpush1.msra.mxu0 0.0
        %808 = vmatprep.subr.mxu0 0.0
        %809 = vmatpush1.msra.mxu0 0.0
        %810 = vmatprep.subr.mxu0 0.0
        %811 = vmatpush1.msra.mxu0 0.0
        %812 = vmatprep.subr.mxu0 0.0
        %813 = vmatpush1.msra.mxu0 0.0
        %814 = vmatprep.subr.mxu0 0.0
        %815 = vmatpush1.msra.mxu0 0.0
        %816 = vmatprep.subr.mxu0 0.0
        %817 = vmatpush1.msra.mxu0 0.0
        %818 = vmatprep.subr.mxu0 0.0
        %819 = vmatpush1.msra.mxu0 0.0
        %820 = vmatprep.subr.mxu0 0.0
        %821 = vmatpush1.msra.mxu0 0.0
        %822 = vmatprep.subr.mxu0 0.0
        %823 = vmatpush1.msra.mxu0 0.0
        %824 = vmatprep.subr.mxu0 0.0
        %825 = vmatpush1.msra.mxu0 0.0
        %826 = vmatprep.subr.mxu0 0.0
        %827 = vmatpush1.msra.mxu0 0.0
        %828 = vmatprep.subr.mxu0 0.0
        %829 = vmatpush1.msra.mxu0 0.0
        %830 = vmatprep.subr.mxu0 0.0
        %831 = vmatpush1.msra.mxu0 0.0
        %832 = vmatprep.subr.mxu0 0.0
        %833 = vmatpush1.msra.mxu0 0.0
        %834 = vmatprep.subr.mxu0 0.0
        %835 = vmatpush1.msra.mxu0 0.0
        %836 = vmatprep.subr.mxu0 0.0
        %837 = vmatpush1.msra.mxu0 0.0
        %838 = vmatprep.subr.mxu0 0.0
        %839 = vmatpush1.msra.mxu0 0.0
        %840 = vmatprep.subr.mxu0 0.0
        %841 = vmatpush1.msra.mxu0 0.0
        %842 = vmatprep.subr.mxu0 0.0
        %843 = vmatpush1.msra.mxu0 0.0
        %844 = vmatprep.subr.mxu0 0.0
        %845 = vmatpush1.msra.mxu0 0.0
        %846 = vmatprep.mubr.f32.mxu0 0.0
        %847 = vmatmul.mubr.f32.gmra.mrb[0].mxu0 %v780
        %v848 = vpop.f32.mrb[0].mxu0
        %v849 = vadd.f32 0.0, %v848
        %v850 = vpop.f32.mrb[0].mxu0
        %851 = vdwg.mxu0
        %853 = vrot.lane.b32.xlu0 %v849, 16
        %v854 = vpop.permute.xlu0 %853
        %v856 = vsel %vm522, %v684, %v854
        %v857 = vld [vmem:[#allocation10] sm:$0xff]
        %v858 = vld [vmem:[#allocation10 + $0x8] sm:$0xff]
        %v859 = vld [vmem:[#allocation10 + $0x10] sm:$0xff]
        %v860 = vld [vmem:[#allocation10 + $0x18] sm:$0xff]
        %v861 = vld [vmem:[%s5] sm:$0x1]
        %v863 = vlaneseq
        %v864 = vshrl.u32 %v863, 7
        %v865 = vsub.s32 0, %v864
        %v866 = vrot.slane %v861, %v865
        %v869 = vsel %vm370, %v856, 0
        %871 = vmatprep.subr.mxu0 0.0
        %872 = vmatpush1.msra.mxu0 %v857
        %873 = vmatprep.subr.mxu0 0.0
        %874 = vmatpush1.msra.mxu0 %v858
        %875 = vmatprep.subr.mxu0 0.0
        %876 = vmatpush1.msra.mxu0 %v859
        %877 = vmatprep.subr.mxu0 0.0
        %878 = vmatpush1.msra.mxu0 %v860
        %879 = vmatprep.subr.mxu0 0.0
        %880 = vmatpush1.msra.mxu0 0.0
        %881 = vmatprep.subr.mxu0 0.0
        %882 = vmatpush1.msra.mxu0 0.0
        %883 = vmatprep.subr.mxu0 0.0
        %884 = vmatpush1.msra.mxu0 0.0
        %885 = vmatprep.subr.mxu0 0.0
        %886 = vmatpush1.msra.mxu0 0.0
        %887 = vmatprep.subr.mxu0 0.0
        %888 = vmatpush1.msra.mxu0 0.0
        %889 = vmatprep.subr.mxu0 0.0
        %890 = vmatpush1.msra.mxu0 0.0
        %891 = vmatprep.subr.mxu0 0.0
        %892 = vmatpush1.msra.mxu0 0.0
        %893 = vmatprep.subr.mxu0 0.0
        %894 = vmatpush1.msra.mxu0 0.0
        %895 = vmatprep.subr.mxu0 0.0
        %896 = vmatpush1.msra.mxu0 0.0
        %897 = vmatprep.subr.mxu0 0.0
        %898 = vmatpush1.msra.mxu0 0.0
        %899 = vmatprep.subr.mxu0 0.0
        %900 = vmatpush1.msra.mxu0 0.0
        %901 = vmatprep.subr.mxu0 0.0
        %902 = vmatpush1.msra.mxu0 0.0
        %903 = vmatprep.subr.mxu0 0.0
        %904 = vmatpush1.msra.mxu0 0.0
        %905 = vmatprep.subr.mxu0 0.0
        %906 = vmatpush1.msra.mxu0 0.0
        %907 = vmatprep.subr.mxu0 0.0
        %908 = vmatpush1.msra.mxu0 0.0
        %909 = vmatprep.subr.mxu0 0.0
        %910 = vmatpush1.msra.mxu0 0.0
        %911 = vmatprep.subr.mxu0 0.0
        %912 = vmatpush1.msra.mxu0 0.0
        %913 = vmatprep.subr.mxu0 0.0
        %914 = vmatpush1.msra.mxu0 0.0
        %915 = vmatprep.subr.mxu0 0.0
        %916 = vmatpush1.msra.mxu0 0.0
        %917 = vmatprep.subr.mxu0 0.0
        %918 = vmatpush1.msra.mxu0 0.0
        %919 = vmatprep.subr.mxu0 0.0
        %920 = vmatpush1.msra.mxu0 0.0
        %921 = vmatprep.subr.mxu0 0.0
        %922 = vmatpush1.msra.mxu0 0.0
        %923 = vmatprep.subr.mxu0 0.0
        %924 = vmatpush1.msra.mxu0 0.0
        %925 = vmatprep.subr.mxu0 0.0
        %926 = vmatpush1.msra.mxu0 0.0
        %927 = vmatprep.subr.mxu0 0.0
        %928 = vmatpush1.msra.mxu0 0.0
        %929 = vmatprep.subr.mxu0 0.0
        %930 = vmatpush1.msra.mxu0 0.0
        %931 = vmatprep.subr.mxu0 0.0
        %932 = vmatpush1.msra.mxu0 0.0
        %933 = vmatprep.subr.mxu0 0.0
        %934 = vmatpush1.msra.mxu0 0.0
        %935 = vmatprep.mubr.f32.mxu0 0.0
        %936 = vmatmul.mubr.f32.gmra.mrb[0].mxu0 %v869
        %v937 = vpop.f32.mrb[0].mxu0
        %v938 = vadd.f32 %v866, %v937
        %v939 = vpop.f32.mrb[0].mxu0
        %940 = vdwg.mxu0
        %941 = vst.msk [vmem:[%s363] sm:$0xff] %vm370, %v938
        %s942 = sand.u32 %s187, 1
        %s943 = scalar_lea.sflag [#allocation4], %s942
        %s944 = sand.u32 %s187, 1
        %s945 = smul.addr %s944, 8
        %s946 = scalar_lea.vmem [#allocation11], %s945
        // Predicated region
        $region65: #{tpu_custom_call.1} parent=43 // pred_check
          %p947 = pneg %p197
        $region66: #{tpu_custom_call.1} parent=43 // pred_check_branch
          %949 = sbr.rel (%p947) target = $region68
        $region67: #{tpu_custom_call.1} parent=43 // pred_region
          %s951 = ssub.s32 128, 128
          %952 = vsyncadd %s943, %s951
          %s953 = sadd.s32 %s32, %s31
          %s954 = smul.addr %s953, 128
          %s955 = scalar_lea.hbm %s6, %s954
          %s957 = sshll.u32 %s946, 4
          %s958 = int_to_ptr.vmem [resolvable:$true] %s957
          %960 = dma.vmem_to_hbm [thread:$0]  %s958, 128, %s955, %s943
        $region68: #{tpu_custom_call.1} parent=43 // pred_fallthru
          _
      $region44: #{tpu_custom_call.1} parent=5 // pred_fallthru
        _
      %p961 = scmp.le.s32.totalorder 2, %s22
      // Predicated region
      $region69: #{tpu_custom_call.1} parent=5 // pred_check
        %p962 = pneg %p961
      $region70: #{tpu_custom_call.1} parent=5 // pred_check_branch
        %964 = sbr.rel (%p962) target = $region72
      $region71: #{tpu_custom_call.1} parent=5 // pred_region
        %s965 = ssub.s32 %s22, 2
        // Predicated region
        $region73: #{tpu_custom_call.1} parent=71 // pred_check
          %p966 = pneg %p203
        $region74: #{tpu_custom_call.1} parent=71 // pred_check_branch
          %968 = sbr.rel (%p966) target = $region76
        $region75: #{tpu_custom_call.1} parent=71 // pred_region
          %s969 = sand.u32 %s188, 1
          %s970 = scalar_lea.sflag [#allocation4], %s969
          %s971 = sand.u32 %s188, 1
          %s972 = smul.addr %s971, 8
          %s973 = scalar_lea.vmem [#allocation11], %s972
          %974 = dma.done %s970, 128
        $region76: #{tpu_custom_call.1} parent=71 // pred_fallthru
          _
      $region72: #{tpu_custom_call.1} parent=5 // pred_fallthru
        _
    $region6: #{tpu_custom_call.1} parent=1 // loop_footer
      %s26 = sadd.s32 1, %s22
    $region7: #{tpu_custom_call.1} parent=1 // loop_footer_branch
      %21 = sbr.rel target = $region3
    $region8: #{tpu_custom_call.1} parent=1 // loop_exit
      _
    %975 = vsyncpa [#allocation3], 1
    %s976 = scalar_lea.sflag [#allocation3], 1
    %977 = vsyncpa %s976, 1
    %978 = vsyncpa [#allocation6], 1
    %s979 = scalar_lea.sflag [#allocation6], 1
    %980 = vsyncpa %s979, 1
    %981 = vsyncpa [#allocation9], 1
    %982 = vsyncpa [#allocation4], 1
    %s983 = scalar_lea.sflag [#allocation4], 1
    %984 = vsyncpa %s983, 1

</llo_original>
